<compile_context>
chip_gen: v7x
topology: tpu7x:2x2x1
jax: 0.10.0
libtpu: 0.0.40
codegen_flags: <defaults>
</compile_context>

<pallas_src>
import functools

import jax
import jax.numpy as jnp
from jax import lax
from jax.experimental import pallas as pl
from jax.experimental.pallas import tpu as pltpu

EPS = 1e-5


# ------------------------------- Pallas kernel ------------------------------ #

def _bottleneck_kernel(x_ref, mask_ref, w1_ref, b1_ref, w2_ref, b2_ref,
                       w3s_ref, b3s_ref, o_ref, *, W):
    """Fused Bottleneck forward for one block of images (batch folded in lanes).

    x_ref   : (1, Cin, L)   channels on sublanes, L = NB*H*W on lanes
    mask_ref: (9, L)        precomputed 3x3 boundary masks (f32 0/1)
    w*_ref  : BN-folded conv weights; w3s = [conv3 | shortcut] merged
    b*_ref  : folded biases (rows, 1); b3s = b3 + bs
    o_ref   : (1, Cout, L)
    """
    cd = w1_ref.dtype                                   # MXU compute dtype
    x = x_ref[0]                                        # (Cin, L) f32
    L = x.shape[1]

    # ---- conv1 (1x1) + bn1 + relu ---------------------------------------
    out1 = jnp.dot(w1_ref[...], x.astype(cd), preferred_element_type=jnp.float32)
    out1 = jnp.maximum(out1 + b1_ref[...], 0.0)         # (P, L) f32

    # ---- conv2 (3x3, pad=1) + bn2 + relu --------------------------------
    # im2col built in-register: tap (dy, dx) is a lane rotate of the flattened
    # image(s); out-of-image pixels are zeroed by the precomputed static mask.
    # Taps stacked on sublanes -> one GEMM with K = 9*P.
    taps = []
    t = 0
    for kdy in (-1, 0, 1):
        for kdx in (-1, 0, 1):
            shift = (-(kdy * W + kdx)) % L               # static
            if kdy == 0 and kdx == 0:
                taps.append(out1)                        # center: mask == 1
            else:
                rolled = pltpu.roll(out1, shift=shift, axis=1)
                taps.append(rolled * mask_ref[pl.ds(t, 1), :])
            t += 1
    taps = jnp.concatenate(taps, axis=0)                 # (9P, L) f32, aligned
    out2 = jnp.dot(w2_ref[...], taps.astype(cd),
                   preferred_element_type=jnp.float32)
    out2 = jnp.maximum(out2 + b2_ref[...], 0.0)          # (P, L) f32

    # ---- conv3 (1x1) + bn3 fused with shortcut (1x1 conv + bn) + relu ----
    merged = jnp.concatenate([out2, x], axis=0)          # (P+Cin, L) f32
    y = jnp.dot(w3s_ref[...], merged.astype(cd),
                preferred_element_type=jnp.float32)
    y = jnp.maximum(y + b3s_ref[...], 0.0)
    o_ref[0] = y.astype(o_ref.dtype)


# ------------------------------ wrapper / glue ------------------------------ #

def _fold_bn(w, bn_params):
    """Fold inference BatchNorm into a conv weight (Cout, K) and bias (Cout, 1)."""
    gamma, beta, mean, var = bn_params
    scale = gamma / jnp.sqrt(var + EPS)
    return w * scale[:, None], (beta - mean * scale)[:, None]


def bottleneck_forward(x_nchw, p, *, compute_dtype=jnp.float32, num_blocks=1):
    """x_nchw: (N, Cin, H, W) float32 -> (N, 4*planes, H, W).

    num_blocks: grid size.  1 = whole batch in one step (v5e/v6e single-TC);
    2 = one block per TensorCore (v7x megacore).  Must divide N.
    """
    N, Cin, H, W = x_nchw.shape
    M = H * W
    planes = p["w1"].shape[0]
    cout = p["w3"].shape[0]
    assert N % num_blocks == 0, (N, num_blocks)
    NB = N // num_blocks
    L = NB * M

    # Fold BN into conv weights once (inference mode), merge conv3 + shortcut.
    w1f, b1 = _fold_bn(p["w1"], p["bn1"])                              # (P, Cin)
    w2_2d = p["w2"].transpose(0, 2, 3, 1).reshape(planes, 9 * planes)  # (P, 9P)
    w2f, b2 = _fold_bn(w2_2d, p["bn2"])
    w3f, b3 = _fold_bn(p["w3"], p["bn3"])                              # (Co, P)
    wsf, bs = _fold_bn(p["ws"], p["bns"])                              # (Co, Cin)
    w3sf = jnp.concatenate([w3f, wsf], axis=1)                         # (Co, P+Cin)
    b3s = b3 + bs

    w1f = w1f.astype(compute_dtype)
    w2f = w2f.astype(compute_dtype)
    w3sf = w3sf.astype(compute_dtype)

    # Static 3x3 boundary masks for the in-kernel im2col (batch folded in lanes):
    # lane = img*M + h*W + w  ->  h = (lane // W) % H, w = lane % W.
    lane = jnp.arange(L)
    h_idx = (lane // W) % H
    w_idx = lane % W
    masks = []
    for dy in (-1, 0, 1):
        for dx in (-1, 0, 1):
            masks.append((h_idx + dy >= 0) & (h_idx + dy < H) &
                         (w_idx + dx >= 0) & (w_idx + dx < W))
    mask = jnp.stack(masks, axis=0).astype(jnp.float32)                # (9, L)

    # (N, Cin, H, W) -> (num_blocks, Cin, NB*M): batch folded into lanes.
    x_blk = (x_nchw.reshape(num_blocks, NB, Cin, M)
             .transpose(0, 2, 1, 3).reshape(num_blocks, Cin, L))

    flops = 2 * N * M * (Cin * planes + 9 * planes * planes
                         + (planes + Cin) * cout)

    def nbytes(a):
        return a.size * a.dtype.itemsize

    bytes_accessed = (sum(nbytes(a) for a in
                          (x_blk, mask, w1f, b1, w2f, b2, w3sf, b3s))
                      + num_blocks * cout * L * x_nchw.dtype.itemsize)

    def const_spec(shape):
        return pl.BlockSpec(shape, lambda g, _s=shape: (0,) * len(_s))

    kernel = functools.partial(_bottleneck_kernel, W=W)
    out = pl.pallas_call(
        kernel,
        out_shape=jax.ShapeDtypeStruct((num_blocks, cout, L), x_nchw.dtype),
        grid=(num_blocks,),
        in_specs=[
            pl.BlockSpec((1, Cin, L), lambda g: (g, 0, 0)),
            const_spec(mask.shape),
            const_spec(w1f.shape), const_spec(b1.shape),
            const_spec(w2f.shape), const_spec(b2.shape),
            const_spec(w3sf.shape), const_spec(b3s.shape),
        ],
        out_specs=pl.BlockSpec((1, cout, L), lambda g: (g, 0, 0)),
        compiler_params=pltpu.CompilerParams(
            dimension_semantics=("parallel",)),
        cost_estimate=pl.CostEstimate(
            flops=flops, transcendentals=0, bytes_accessed=bytes_accessed),
    )(x_blk, mask, w1f, b1, w2f, b2, w3sf, b3s)

    return (out.reshape(num_blocks, cout, NB, M)
            .transpose(0, 2, 1, 3).reshape(N, cout, H, W))


# --------------------------- params & pure-JAX reference -------------------- #

def init_params(key, in_planes, planes, expansion=4):
    cout = expansion * planes
    ks = jax.random.split(key, 8)

    def w(k, shape, fan_in):
        return jax.random.normal(k, shape, jnp.float32) / jnp.sqrt(fan_in)

    def bn(k, c):
        k1, k2, k3, k4 = jax.random.split(k, 4)
        gamma = 1.0 + 0.1 * jax.random.normal(k1, (c,), jnp.float32)
        beta = 0.1 * jax.random.normal(k2, (c,), jnp.float32)
        mean = 0.1 * jax.random.normal(k3, (c,), jnp.float32)
        var = 1.0 + 0.1 * jax.random.uniform(k4, (c,), jnp.float32)
        return (gamma, beta, mean, var)

    return dict(
        w1=w(ks[0], (planes, in_planes), in_planes),       # conv1 1x1: (O, I)
        bn1=bn(ks[1], planes),
        w2=w(ks[2], (planes, planes, 3, 3), 9 * planes),   # conv2 3x3: OIHW
        bn2=bn(ks[3], planes),
        w3=w(ks[4], (cout, planes), planes),               # conv3 1x1: (O, I)
        bn3=bn(ks[5], cout),
        ws=w(ks[6], (cout, in_planes), in_planes),         # shortcut 1x1 conv
        bns=bn(ks[7], cout),
    )


def reference_forward(x, p):
    dn = ("NCHW", "OIHW", "NCHW")

    def conv1x1(x, w):
        return lax.conv_general_dilated(x, w[:, :, None, None], (1, 1), "VALID",
                                        dimension_numbers=dn,
                                        precision=lax.Precision.HIGHEST)

    def conv3x3(x, w):
        return lax.conv_general_dilated(x, w, (1, 1), "SAME",
                                        dimension_numbers=dn,
                                        precision=lax.Precision.HIGHEST)

    def bn(x, prm):
        gamma, beta, mean, var = prm
        scale = (gamma / jnp.sqrt(var + EPS))[None, :, None, None]
        shift = (beta - mean * gamma / jnp.sqrt(var + EPS))[None, :, None, None]
        return x * scale + shift

    out = jax.nn.relu(bn(conv1x1(x, p["w1"]), p["bn1"]))
    out = jax.nn.relu(bn(conv3x3(out, p["w2"]), p["bn2"]))
    out = bn(conv1x1(out, p["w3"]), p["bn3"])
    sc = bn(conv1x1(x, p["ws"]), p["bns"])
    return jax.nn.relu(out + sc)


# ------------------------------------ main ---------------------------------- #

if __name__ == "__main__":
    key = jax.random.PRNGKey(0)
    kx, kp = jax.random.split(key)

    N, Cin, H, W = 2, 16, 16, 16     # PyTorch NCHW input: (2, 16, 16, 16)
    planes = 8                       # Bottleneck(16, 8) -> out channels = 32

    x_nchw = jax.random.normal(kx, (N, Cin, H, W), jnp.float32)
    params = init_params(kp, Cin, planes)
    ref = jax.block_until_ready(reference_forward(x_nchw, params))

    # f32, whole batch folded into one grid step (v5e / v6e single-TC config).
    out = jax.block_until_ready(bottleneck_forward(x_nchw, params))
    assert out.shape == (N, 4 * planes, H, W), out.shape
    assert jnp.allclose(out, ref, atol=2e-3, rtol=2e-3), \
        float(jnp.max(jnp.abs(out - ref)))

    # v7x-style: two "parallel" grid blocks (one image per TensorCore).
    out_2tc = jax.block_until_ready(
        bottleneck_forward(x_nchw, params, num_blocks=2))
    assert jnp.allclose(out_2tc, ref, atol=2e-3, rtol=2e-3), \
        float(jnp.max(jnp.abs(out_2tc - ref)))

    # bf16 MXU inputs, f32 accumulation + f32 bias/ReLU epilogue.
    out_bf16 = jax.block_until_ready(
        bottleneck_forward(x_nchw, params, compute_dtype=jnp.bfloat16))
    assert jnp.allclose(out_bf16, ref, atol=5e-2, rtol=5e-2), \
        float(jnp.max(jnp.abs(out_bf16 - ref)))

    print("KERNEL_OK")
</pallas_src>

<mosaic_0001>
module attributes {stable_mosaic.version = 11 : i64} {
  func.func @_bottleneck_kernel(%arg0: i32, %arg1: memref<1x16x512xf32, #tpu.memory_space<vmem>>, %arg2: memref<9x512xf32, #tpu.memory_space<vmem>>, %arg3: memref<8x16xf32, #tpu.memory_space<vmem>>, %arg4: memref<8x1xf32, #tpu.memory_space<vmem>>, %arg5: memref<8x72xf32, #tpu.memory_space<vmem>>, %arg6: memref<8x1xf32, #tpu.memory_space<vmem>>, %arg7: memref<32x24xf32, #tpu.memory_space<vmem>>, %arg8: memref<32x1xf32, #tpu.memory_space<vmem>>, %arg9: memref<1x32x512xf32, #tpu.memory_space<vmem>>) attributes {dimension_semantics = [#tpu.dimension_semantics<parallel>], iteration_bounds = array<i64: 1>, scalar_prefetch = 0 : i64, scratch_operands = 0 : i64, tpu.core_type = #tpu.core_type<tc>, window_params = [{transform_indices = @transform_0, window_bounds = array<i64: 1, 16, 512>}, {pipeline_mode = #tpu.pipeline_mode<synchronous>, transform_indices = @transform_1, window_bounds = array<i64: 9, 512>}, {pipeline_mode = #tpu.pipeline_mode<synchronous>, transform_indices = @transform_2, window_bounds = array<i64: 8, 16>}, {pipeline_mode = #tpu.pipeline_mode<synchronous>, transform_indices = @transform_3, window_bounds = array<i64: 8, 1>}, {pipeline_mode = #tpu.pipeline_mode<synchronous>, transform_indices = @transform_4, window_bounds = array<i64: 8, 72>}, {pipeline_mode = #tpu.pipeline_mode<synchronous>, transform_indices = @transform_5, window_bounds = array<i64: 8, 1>}, {pipeline_mode = #tpu.pipeline_mode<synchronous>, transform_indices = @transform_6, window_bounds = array<i64: 32, 24>}, {pipeline_mode = #tpu.pipeline_mode<synchronous>, transform_indices = @transform_7, window_bounds = array<i64: 32, 1>}, {transform_indices = @transform_8, window_bounds = array<i64: 1, 32, 512>}]} {
    %c0 = arith.constant 0 : index
    %c0_0 = arith.constant 0 : index
    %c0_1 = arith.constant 0 : index
    %0 = vector.load %arg1[%c0, %c0_0, %c0_1] : memref<1x16x512xf32, #tpu.memory_space<vmem>>, vector<1x16x512xf32>
    %1 = vector.shape_cast %0 : vector<1x16x512xf32> to vector<16x512xf32>
    %c0_2 = arith.constant 0 : index
    %c0_3 = arith.constant 0 : index
    %2 = vector.load %arg3[%c0_2, %c0_3] : memref<8x16xf32, #tpu.memory_space<vmem>>, vector<8x16xf32>
    %cst = arith.constant dense<0.000000e+00> : vector<8x512xf32>
    %3 = tpu.matmul %2, %1, %cst {dimension_numbers = #tpu.dot_dimension_numbers<[1], [0], [0], [1], [0, 0, 1, 1], [], []>} : vector<8x16xf32>, vector<16x512xf32>, vector<8x512xf32> -> vector<8x512xf32>
    %c0_4 = arith.constant 0 : index
    %c0_5 = arith.constant 0 : index
    %4 = vector.load %arg4[%c0_4, %c0_5] : memref<8x1xf32, #tpu.memory_space<vmem>>, vector<8x1xf32>
    %5 = vector.broadcast %4 : vector<8x1xf32> to vector<8x512xf32>
    %6 = arith.addf %3, %5 : vector<8x512xf32>
    %cst_6 = arith.constant 0.000000e+00 : f32
    %7 = vector.broadcast %cst_6 : f32 to vector<8x512xf32>
    %8 = arith.maximumf %6, %7 : vector<8x512xf32>
    %c17_i32 = arith.constant 17 : i32
    %9 = tpu.dynamic_rotate %8 by %c17_i32 dim 1 : vector<8x512xf32>, i32 -> vector<8x512xf32>
    %c0_7 = arith.constant 0 : index
    %c0_8 = arith.constant 0 : index
    %10 = vector.load %arg2[%c0_7, %c0_8] : memref<9x512xf32, #tpu.memory_space<vmem>>, vector<1x512xf32>
    %11 = vector.broadcast %10 : vector<1x512xf32> to vector<8x512xf32>
    %12 = arith.mulf %9, %11 : vector<8x512xf32>
    %c16_i32 = arith.constant 16 : i32
    %13 = tpu.dynamic_rotate %8 by %c16_i32 dim 1 : vector<8x512xf32>, i32 -> vector<8x512xf32>
    %c1 = arith.constant 1 : index
    %c0_9 = arith.constant 0 : index
    %14 = vector.load %arg2[%c1, %c0_9] : memref<9x512xf32, #tpu.memory_space<vmem>>, vector<1x512xf32>
    %15 = vector.broadcast %14 : vector<1x512xf32> to vector<8x512xf32>
    %16 = arith.mulf %13, %15 : vector<8x512xf32>
    %c15_i32 = arith.constant 15 : i32
    %17 = tpu.dynamic_rotate %8 by %c15_i32 dim 1 : vector<8x512xf32>, i32 -> vector<8x512xf32>
    %c2 = arith.constant 2 : index
    %c0_10 = arith.constant 0 : index
    %18 = vector.load %arg2[%c2, %c0_10] : memref<9x512xf32, #tpu.memory_space<vmem>>, vector<1x512xf32>
    %19 = vector.broadcast %18 : vector<1x512xf32> to vector<8x512xf32>
    %20 = arith.mulf %17, %19 : vector<8x512xf32>
    %c1_i32 = arith.constant 1 : i32
    %21 = tpu.dynamic_rotate %8 by %c1_i32 dim 1 : vector<8x512xf32>, i32 -> vector<8x512xf32>
    %c3 = arith.constant 3 : index
    %c0_11 = arith.constant 0 : index
    %22 = vector.load %arg2[%c3, %c0_11] : memref<9x512xf32, #tpu.memory_space<vmem>>, vector<1x512xf32>
    %23 = vector.broadcast %22 : vector<1x512xf32> to vector<8x512xf32>
    %24 = arith.mulf %21, %23 : vector<8x512xf32>
    %c511_i32 = arith.constant 511 : i32
    %25 = tpu.dynamic_rotate %8 by %c511_i32 dim 1 : vector<8x512xf32>, i32 -> vector<8x512xf32>
    %c5 = arith.constant 5 : index
    %c0_12 = arith.constant 0 : index
    %26 = vector.load %arg2[%c5, %c0_12] : memref<9x512xf32, #tpu.memory_space<vmem>>, vector<1x512xf32>
    %27 = vector.broadcast %26 : vector<1x512xf32> to vector<8x512xf32>
    %28 = arith.mulf %25, %27 : vector<8x512xf32>
    %c497_i32 = arith.constant 497 : i32
    %29 = tpu.dynamic_rotate %8 by %c497_i32 dim 1 : vector<8x512xf32>, i32 -> vector<8x512xf32>
    %c6 = arith.constant 6 : index
    %c0_13 = arith.constant 0 : index
    %30 = vector.load %arg2[%c6, %c0_13] : memref<9x512xf32, #tpu.memory_space<vmem>>, vector<1x512xf32>
    %31 = vector.broadcast %30 : vector<1x512xf32> to vector<8x512xf32>
    %32 = arith.mulf %29, %31 : vector<8x512xf32>
    %c496_i32 = arith.constant 496 : i32
    %33 = tpu.dynamic_rotate %8 by %c496_i32 dim 1 : vector<8x512xf32>, i32 -> vector<8x512xf32>
    %c7 = arith.constant 7 : index
    %c0_14 = arith.constant 0 : index
    %34 = vector.load %arg2[%c7, %c0_14] : memref<9x512xf32, #tpu.memory_space<vmem>>, vector<1x512xf32>
    %35 = vector.broadcast %34 : vector<1x512xf32> to vector<8x512xf32>
    %36 = arith.mulf %33, %35 : vector<8x512xf32>
    %c495_i32 = arith.constant 495 : i32
    %37 = tpu.dynamic_rotate %8 by %c495_i32 dim 1 : vector<8x512xf32>, i32 -> vector<8x512xf32>
    %c8 = arith.constant 8 : index
    %c0_15 = arith.constant 0 : index
    %38 = vector.load %arg2[%c8, %c0_15] : memref<9x512xf32, #tpu.memory_space<vmem>>, vector<1x512xf32>
    %39 = vector.broadcast %38 : vector<1x512xf32> to vector<8x512xf32>
    %40 = arith.mulf %37, %39 : vector<8x512xf32>
    %41 = tpu.concatenate %12, %16, %20, %24, %8, %28, %32, %36, %40 in 0 : vector<8x512xf32>, vector<8x512xf32>, vector<8x512xf32>, vector<8x512xf32>, vector<8x512xf32>, vector<8x512xf32>, vector<8x512xf32>, vector<8x512xf32>, vector<8x512xf32> -> vector<72x512xf32>
    %c0_16 = arith.constant 0 : index
    %c0_17 = arith.constant 0 : index
    %42 = vector.load %arg5[%c0_16, %c0_17] : memref<8x72xf32, #tpu.memory_space<vmem>>, vector<8x72xf32>
    %cst_18 = arith.constant dense<0.000000e+00> : vector<8x512xf32>
    %43 = tpu.matmul %42, %41, %cst_18 {dimension_numbers = #tpu.dot_dimension_numbers<[1], [0], [0], [1], [0, 0, 1, 1], [], []>} : vector<8x72xf32>, vector<72x512xf32>, vector<8x512xf32> -> vector<8x512xf32>
    %c0_19 = arith.constant 0 : index
    %c0_20 = arith.constant 0 : index
    %44 = vector.load %arg6[%c0_19, %c0_20] : memref<8x1xf32, #tpu.memory_space<vmem>>, vector<8x1xf32>
    %45 = vector.broadcast %44 : vector<8x1xf32> to vector<8x512xf32>
    %46 = arith.addf %43, %45 : vector<8x512xf32>
    %cst_21 = arith.constant 0.000000e+00 : f32
    %47 = vector.broadcast %cst_21 : f32 to vector<8x512xf32>
    %48 = arith.maximumf %46, %47 : vector<8x512xf32>
    %49 = tpu.concatenate %48, %1 in 0 : vector<8x512xf32>, vector<16x512xf32> -> vector<24x512xf32>
    %c0_22 = arith.constant 0 : index
    %c0_23 = arith.constant 0 : index
    %50 = vector.load %arg7[%c0_22, %c0_23] : memref<32x24xf32, #tpu.memory_space<vmem>>, vector<32x24xf32>
    %cst_24 = arith.constant dense<0.000000e+00> : vector<32x512xf32>
    %51 = tpu.matmul %50, %49, %cst_24 {dimension_numbers = #tpu.dot_dimension_numbers<[1], [0], [0], [1], [0, 0, 1, 1], [], []>} : vector<32x24xf32>, vector<24x512xf32>, vector<32x512xf32> -> vector<32x512xf32>
    %c0_25 = arith.constant 0 : index
    %c0_26 = arith.constant 0 : index
    %52 = vector.load %arg8[%c0_25, %c0_26] : memref<32x1xf32, #tpu.memory_space<vmem>>, vector<32x1xf32>
    %53 = vector.broadcast %52 : vector<32x1xf32> to vector<32x512xf32>
    %54 = arith.addf %51, %53 : vector<32x512xf32>
    %cst_27 = arith.constant 0.000000e+00 : f32
    %55 = vector.broadcast %cst_27 : f32 to vector<32x512xf32>
    %56 = arith.maximumf %54, %55 : vector<32x512xf32>
    %c0_28 = arith.constant 0 : index
    %c0_29 = arith.constant 0 : index
    %c0_30 = arith.constant 0 : index
    %57 = vector.load %arg9[%c0_28, %c0_29, %c0_30] : memref<1x32x512xf32, #tpu.memory_space<vmem>>, vector<1x32x512xf32>
    %58 = vector.shape_cast %57 : vector<1x32x512xf32> to vector<32x512xf32>
    %59 = vector.shape_cast %56 : vector<32x512xf32> to vector<1x32x512xf32>
    tpu.vector_store %arg9[%c0_28, %c0_29, %c0_30], %59 {strides = array<i32>} : memref<1x32x512xf32, #tpu.memory_space<vmem>>, vector<1x32x512xf32>,
    return
  }
  func.func @transform_0(%arg0: i32) -> (i32, i32, i32) {
    %c0_i32 = arith.constant 0 : i32
    %c0_i32_0 = arith.constant 0 : i32
    %c0_i32_1 = arith.constant 0 : i32
    return %arg0, %c0_i32, %c0_i32_0 : i32, i32, i32
  }
  func.func @transform_1(%arg0: i32) -> (i32, i32) {
    %c0_i32 = arith.constant 0 : i32
    %c0_i32_0 = arith.constant 0 : i32
    %c0_i32_1 = arith.constant 0 : i32
    return %c0_i32, %c0_i32_0 : i32, i32
  }
  func.func @transform_2(%arg0: i32) -> (i32, i32) {
    %c0_i32 = arith.constant 0 : i32
    %c0_i32_0 = arith.constant 0 : i32
    %c0_i32_1 = arith.constant 0 : i32
    return %c0_i32, %c0_i32_0 : i32, i32
  }
  func.func @transform_3(%arg0: i32) -> (i32, i32) {
    %c0_i32 = arith.constant 0 : i32
    %c0_i32_0 = arith.constant 0 : i32
    %c0_i32_1 = arith.constant 0 : i32
    return %c0_i32, %c0_i32_0 : i32, i32
  }
  func.func @transform_4(%arg0: i32) -> (i32, i32) {
    %c0_i32 = arith.constant 0 : i32
    %c0_i32_0 = arith.constant 0 : i32
    %c0_i32_1 = arith.constant 0 : i32
    return %c0_i32, %c0_i32_0 : i32, i32
  }
  func.func @transform_5(%arg0: i32) -> (i32, i32) {
    %c0_i32 = arith.constant 0 : i32
    %c0_i32_0 = arith.constant 0 : i32
    %c0_i32_1 = arith.constant 0 : i32
    return %c0_i32, %c0_i32_0 : i32, i32
  }
  func.func @transform_6(%arg0: i32) -> (i32, i32) {
    %c0_i32 = arith.constant 0 : i32
    %c0_i32_0 = arith.constant 0 : i32
    %c0_i32_1 = arith.constant 0 : i32
    return %c0_i32, %c0_i32_0 : i32, i32
  }
  func.func @transform_7(%arg0: i32) -> (i32, i32) {
    %c0_i32 = arith.constant 0 : i32
    %c0_i32_0 = arith.constant 0 : i32
    %c0_i32_1 = arith.constant 0 : i32
    return %c0_i32, %c0_i32_0 : i32, i32
  }
  func.func @transform_8(%arg0: i32) -> (i32, i32, i32) {
    %c0_i32 = arith.constant 0 : i32
    %c0_i32_0 = arith.constant 0 : i32
    %c0_i32_1 = arith.constant 0 : i32
    return %arg0, %c0_i32, %c0_i32_0 : i32, i32, i32
  }
}

</mosaic_0001>

<llo_original>
// kernel: tpu_custom_call.1
$region0: #{tpu_custom_call.1}
  #allocation0 [shape = 'u32[]', space=smem, size = 0x4, offset = 0x4, fixed_abs, tag = 'smem constant byte address 0x4 - core index']
  #allocation1 [shape = 'u32[144,128]{1,0:T(1,128)}', space=vmem, size = 0x12000, scoped, tag = 'internal scratch']
  %s0 = inlined_call_operand.vmem [shape: f32[1,16,512], index: 0, kind: input, shape index: {}]
  %s1 = inlined_call_operand.hbm [shape: f32[9,512], index: 1, kind: input, shape index: {}]
  %s2 = inlined_call_operand.vmem [shape: f32[8,16], index: 2, kind: input, shape index: {}]
  %s3 = inlined_call_operand.vmem [shape: f32[8,1], index: 3, kind: input, shape index: {}]
  %s4 = inlined_call_operand.vmem [shape: f32[8,72], index: 4, kind: input, shape index: {}]
  %s5 = inlined_call_operand.vmem [shape: f32[8,1], index: 5, kind: input, shape index: {}]
  %s6 = inlined_call_operand.vmem [shape: f32[32,24], index: 6, kind: input, shape index: {}]
  %s7 = inlined_call_operand.vmem [shape: f32[32,1], index: 7, kind: input, shape index: {}]
  %s8 = inlined_call_operand.hbm [shape: f32[1,32,512], index: 8, kind: output, shape index: {}]
  %s9 = sld [smem:[#allocation0]]
  $region46: #{tpu_custom_call.1} parent=0
    _
  %s11 = ssub.s32 1, %s9
  %s12 = scalar_select 0, %s11, %s9
  $region1: #{tpu_custom_call.1} parent=0
    #allocation2 [shape = 'u8[32768]{0}', space=vmem, size = 0x8000, scoped, tag = 'input window, operand 1, single buffered']
    #allocation3 [shape = 's32[1]{0}', space=sflag, size = 0x4, scoped, tag = 'scoped memory for tpu_custom_call.1']
    #allocation4 [shape = 's32[1]{0}', space=sflag, size = 0x4, scoped, tag = 'scoped memory for tpu_custom_call.1']
    #allocation5 [shape = 'u8[65536]{0}', space=vmem, size = 0x10000, scoped, tag = 'output window, operand 0, single buffered']
    %13 = vsyncpa [#allocation3], 0
    %14 = vsyncpa [#allocation4], 0
    // Predicated region
    $region2: #{tpu_custom_call.1} parent=1 // pred_check
      _
    $region3: #{tpu_custom_call.1} parent=1 // pred_check_branch
      %16 = sbr.rel (0) target = $region5
    $region4: #{tpu_custom_call.1} parent=1 // pred_region
      _
    $region5: #{tpu_custom_call.1} parent=1 // pred_fallthru
      _
    // Predicated region
    $region6: #{tpu_custom_call.1} parent=1 // pred_check
      _
    $region7: #{tpu_custom_call.1} parent=1 // pred_check_branch
      %18 = sbr.rel (0) target = $region9
    $region8: #{tpu_custom_call.1} parent=1 // pred_region
      %s20 = ssub.s32 1024, 1024
      %21 = vsyncadd [#allocation3], %s20
      %s22 = sshll.u32 [#allocation2], 4
      %s23 = int_to_ptr.vmem [resolvable:$true] %s22
      %28 = dma.hbm_to_vmem [thread:$0]  %s1, 1024, %s23, [#allocation3], 512, 512, 32
    $region9: #{tpu_custom_call.1} parent=1 // pred_fallthru
      _
    // Predicated region
    $region10: #{tpu_custom_call.1} parent=1 // pred_check
      _
    $region11: #{tpu_custom_call.1} parent=1 // pred_check_branch
      %30 = sbr.rel (0) target = $region13
    $region12: #{tpu_custom_call.1} parent=1 // pred_region
      _
    $region13: #{tpu_custom_call.1} parent=1 // pred_fallthru
      _
    // Predicated region
    $region14: #{tpu_custom_call.1} parent=1 // pred_check
      _
    $region15: #{tpu_custom_call.1} parent=1 // pred_check_branch
      %32 = sbr.rel (0) target = $region17
    $region16: #{tpu_custom_call.1} parent=1 // pred_region
      _
    $region17: #{tpu_custom_call.1} parent=1 // pred_fallthru
      _
    // Predicated region
    $region18: #{tpu_custom_call.1} parent=1 // pred_check
      _
    $region19: #{tpu_custom_call.1} parent=1 // pred_check_branch
      %34 = sbr.rel (0) target = $region21
    $region20: #{tpu_custom_call.1} parent=1 // pred_region
      _
    $region21: #{tpu_custom_call.1} parent=1 // pred_fallthru
      _
    // Predicated region
    $region22: #{tpu_custom_call.1} parent=1 // pred_check
      _
    $region23: #{tpu_custom_call.1} parent=1 // pred_check_branch
      %36 = sbr.rel (0) target = $region25
    $region24: #{tpu_custom_call.1} parent=1 // pred_region
      _
    $region25: #{tpu_custom_call.1} parent=1 // pred_fallthru
      _
    // Predicated region
    $region26: #{tpu_custom_call.1} parent=1 // pred_check
      _
    $region27: #{tpu_custom_call.1} parent=1 // pred_check_branch
      %38 = sbr.rel (0) target = $region29
    $region28: #{tpu_custom_call.1} parent=1 // pred_region
      _
    $region29: #{tpu_custom_call.1} parent=1 // pred_fallthru
      _
    // Predicated region
    $region30: #{tpu_custom_call.1} parent=1 // pred_check
      _
    $region31: #{tpu_custom_call.1} parent=1 // pred_check_branch
      %40 = sbr.rel (0) target = $region33
    $region32: #{tpu_custom_call.1} parent=1 // pred_region
      _
    $region33: #{tpu_custom_call.1} parent=1 // pred_fallthru
      _
    // Predicated region
    $region34: #{tpu_custom_call.1} parent=1 // pred_check
      _
    $region35: #{tpu_custom_call.1} parent=1 // pred_check_branch
      %42 = sbr.rel (0) target = $region37
    $region36: #{tpu_custom_call.1} parent=1 // pred_region
      %43 = dma.done [#allocation3], 1024
    $region37: #{tpu_custom_call.1} parent=1 // pred_fallthru
      _
    %v44 = vld [vmem:[%s0] sm:$0xff]
    %v45 = vld [vmem:[%s0 + $0x8] sm:$0xff]
    %v46 = vld [vmem:[%s0 + $0x10] sm:$0xff]
    %v47 = vld [vmem:[%s0 + $0x18] sm:$0xff]
    %v48 = vld [vmem:[%s0 + $0x20] sm:$0xff]
    %v49 = vld [vmem:[%s0 + $0x28] sm:$0xff]
    %v50 = vld [vmem:[%s0 + $0x30] sm:$0xff]
    %v51 = vld [vmem:[%s0 + $0x38] sm:$0xff]
    %v52 = vld [vmem:[%s2] sm:$0xff]
    %v53 = vld [vmem:[%s3] sm:$0xff]
    %55 = vset.pattern.permute.xlu0 0
    %56 = vperm.xlu0 %55, %v53
    %v57 = vpop.permute.xlu0 %56
    %vm59 = vcmask 130048
    %v61 = vsel %vm59, %v52, 0
    %63 = vmatprep.subr.mxu0 %v45
    %64 = vmatpush1.msra.mxu0 %v44
    %65 = vmatprep.subr.mxu0 %v49
    %66 = vmatpush1.msra.mxu0 %v48
    %67 = vmatprep.subr.mxu0 0.0
    %68 = vmatpush1.msra.mxu0 0.0
    %69 = vmatprep.subr.mxu0 0.0
    %70 = vmatpush1.msra.mxu0 0.0
    %71 = vmatprep.subr.mxu0 0.0
    %72 = vmatpush1.msra.mxu0 0.0
    %73 = vmatprep.subr.mxu0 0.0
    %74 = vmatpush1.msra.mxu0 0.0
    %75 = vmatprep.subr.mxu0 0.0
    %76 = vmatpush1.msra.mxu0 0.0
    %77 = vmatprep.subr.mxu0 0.0
    %78 = vmatpush1.msra.mxu0 0.0
    %79 = vmatprep.subr.mxu0 0.0
    %80 = vmatpush1.msra.mxu0 0.0
    %81 = vmatprep.subr.mxu0 0.0
    %82 = vmatpush1.msra.mxu0 0.0
    %83 = vmatprep.subr.mxu0 0.0
    %84 = vmatpush1.msra.mxu0 0.0
    %85 = vmatprep.subr.mxu0 0.0
    %86 = vmatpush1.msra.mxu0 0.0
    %87 = vmatprep.subr.mxu0 0.0
    %88 = vmatpush1.msra.mxu0 0.0
    %89 = vmatprep.subr.mxu0 0.0
    %90 = vmatpush1.msra.mxu0 0.0
    %91 = vmatprep.subr.mxu0 0.0
    %92 = vmatpush1.msra.mxu0 0.0
    %93 = vmatprep.subr.mxu0 0.0
    %94 = vmatpush1.msra.mxu0 0.0
    %95 = vmatprep.subr.mxu0 0.0
    %96 = vmatpush1.msra.mxu0 0.0
    %97 = vmatprep.subr.mxu0 0.0
    %98 = vmatpush1.msra.mxu0 0.0
    %99 = vmatprep.subr.mxu0 0.0
    %100 = vmatpush1.msra.mxu0 0.0
    %101 = vmatprep.subr.mxu0 0.0
    %102 = vmatpush1.msra.mxu0 0.0
    %103 = vmatprep.subr.mxu0 0.0
    %104 = vmatpush1.msra.mxu0 0.0
    %105 = vmatprep.subr.mxu0 0.0
    %106 = vmatpush1.msra.mxu0 0.0
    %107 = vmatprep.subr.mxu0 0.0
    %108 = vmatpush1.msra.mxu0 0.0
    %109 = vmatprep.subr.mxu0 0.0
    %110 = vmatpush1.msra.mxu0 0.0
    %111 = vmatprep.subr.mxu0 0.0
    %112 = vmatpush1.msra.mxu0 0.0
    %113 = vmatprep.subr.mxu0 0.0
    %114 = vmatpush1.msra.mxu0 0.0
    %115 = vmatprep.subr.mxu0 0.0
    %116 = vmatpush1.msra.mxu0 0.0
    %117 = vmatprep.subr.mxu0 0.0
    %118 = vmatpush1.msra.mxu0 0.0
    %119 = vmatprep.subr.mxu0 0.0
    %120 = vmatpush1.msra.mxu0 0.0
    %121 = vmatprep.subr.mxu0 0.0
    %122 = vmatpush1.msra.mxu0 0.0
    %123 = vmatprep.subr.mxu0 0.0
    %124 = vmatpush1.msra.mxu0 0.0
    %125 = vmatprep.subr.mxu0 0.0
    %126 = vmatpush1.msra.mxu0 0.0
    %127 = vmatprep.mubr.f32.mxu0 0.0
    %128 = vmatmul.mubr.f32.gmra.mrb[0].mxu0 %v61
    %v129 = vpop.f32.mrb[0].mxu0
    %v130 = vadd.f32 %v57, %v129
    %v131 = vpop.f32.mrb[0].mxu0
    %v132 = vadd.f32 %v57, %v131
    %133 = vdwg.mxu0
    %134 = vmatprep.subr.mxu0 %v47
    %135 = vmatpush1.msra.mxu0 %v46
    %136 = vmatprep.subr.mxu0 %v51
    %137 = vmatpush1.msra.mxu0 %v50
    %138 = vmatprep.subr.mxu0 0.0
    %139 = vmatpush1.msra.mxu0 0.0
    %140 = vmatprep.subr.mxu0 0.0
    %141 = vmatpush1.msra.mxu0 0.0
    %142 = vmatprep.subr.mxu0 0.0
    %143 = vmatpush1.msra.mxu0 0.0
    %144 = vmatprep.subr.mxu0 0.0
    %145 = vmatpush1.msra.mxu0 0.0
    %146 = vmatprep.subr.mxu0 0.0
    %147 = vmatpush1.msra.mxu0 0.0
    %148 = vmatprep.subr.mxu0 0.0
    %149 = vmatpush1.msra.mxu0 0.0
    %150 = vmatprep.subr.mxu0 0.0
    %151 = vmatpush1.msra.mxu0 0.0
    %152 = vmatprep.subr.mxu0 0.0
    %153 = vmatpush1.msra.mxu0 0.0
    %154 = vmatprep.subr.mxu0 0.0
    %155 = vmatpush1.msra.mxu0 0.0
    %156 = vmatprep.subr.mxu0 0.0
    %157 = vmatpush1.msra.mxu0 0.0
    %158 = vmatprep.subr.mxu0 0.0
    %159 = vmatpush1.msra.mxu0 0.0
    %160 = vmatprep.subr.mxu0 0.0
    %161 = vmatpush1.msra.mxu0 0.0
    %162 = vmatprep.subr.mxu0 0.0
    %163 = vmatpush1.msra.mxu0 0.0
    %164 = vmatprep.subr.mxu0 0.0
    %165 = vmatpush1.msra.mxu0 0.0
    %166 = vmatprep.subr.mxu0 0.0
    %167 = vmatpush1.msra.mxu0 0.0
    %168 = vmatprep.subr.mxu0 0.0
    %169 = vmatpush1.msra.mxu0 0.0
    %170 = vmatprep.subr.mxu0 0.0
    %171 = vmatpush1.msra.mxu0 0.0
    %172 = vmatprep.subr.mxu0 0.0
    %173 = vmatpush1.msra.mxu0 0.0
    %174 = vmatprep.subr.mxu0 0.0
    %175 = vmatpush1.msra.mxu0 0.0
    %176 = vmatprep.subr.mxu0 0.0
    %177 = vmatpush1.msra.mxu0 0.0
    %178 = vmatprep.subr.mxu0 0.0
    %179 = vmatpush1.msra.mxu0 0.0
    %180 = vmatprep.subr.mxu0 0.0
    %181 = vmatpush1.msra.mxu0 0.0
    %182 = vmatprep.subr.mxu0 0.0
    %183 = vmatpush1.msra.mxu0 0.0
    %184 = vmatprep.subr.mxu0 0.0
    %185 = vmatpush1.msra.mxu0 0.0
    %186 = vmatprep.subr.mxu0 0.0
    %187 = vmatpush1.msra.mxu0 0.0
    %188 = vmatprep.subr.mxu0 0.0
    %189 = vmatpush1.msra.mxu0 0.0
    %190 = vmatprep.subr.mxu0 0.0
    %191 = vmatpush1.msra.mxu0 0.0
    %192 = vmatprep.subr.mxu0 0.0
    %193 = vmatpush1.msra.mxu0 0.0
    %194 = vmatprep.subr.mxu0 0.0
    %195 = vmatpush1.msra.mxu0 0.0
    %196 = vmatprep.subr.mxu0 0.0
    %197 = vmatpush1.msra.mxu0 0.0
    %198 = vmatprep.mubr.f32.mxu0 0.0
    %199 = vmatmul.mubr.f32.gmra.mrb[0].mxu0 %v61
    %v200 = vpop.f32.mrb[0].mxu0
    %v201 = vadd.f32 %v57, %v200
    %v202 = vpop.f32.mrb[0].mxu0
    %v203 = vadd.f32 %v57, %v202
    %204 = vdwg.mxu0
    %v205 = vmax.f32 %v130, 0.0
    %v206 = vmax.f32 %v132, 0.0
    %v207 = vmax.f32 %v201, 0.0
    %v208 = vmax.f32 %v203, 0.0
    %209 = vrot.lane.b32.xlu0 %v205, 17
    %v210 = vpop.permute.xlu0 %209
    %211 = vrot.lane.b32.xlu0 %v206, 17
    %v212 = vpop.permute.xlu0 %211
    %213 = vrot.lane.b32.xlu0 %v207, 17
    %v214 = vpop.permute.xlu0 %213
    %215 = vrot.lane.b32.xlu0 %v208, 17
    %v216 = vpop.permute.xlu0 %215
    %v217 = vlaneseq
    %v218 = vand.u32 %v217, 127
    %vm219 = vcmp.lt.s32.totalorder %v218, 17
    %v220 = vsel %vm219, %v214, %v216
    %v221 = vsel %vm219, %v212, %v214
    %v222 = vsel %vm219, %v210, %v212
    %v223 = vsel %vm219, %v216, %v210
    %v224 = vld [vmem:[#allocation2] ss:$8 sm:$0xf]
    %v226 = vlaneseq
    %v227 = vshrl.u32 %v226, 7
    %v228 = vsub.s32 0, %v227
    %v229 = vrot.slane %v224, %v228
    %v230 = vlaneseq
    %v231 = vshrl.u32 %v230, 7
    %v232 = vsub.s32 1, %v231
    %v233 = vrot.slane %v224, %v232
    %v234 = vlaneseq
    %v235 = vshrl.u32 %v234, 7
    %v236 = vsub.s32 2, %v235
    %v237 = vrot.slane %v224, %v236
    %v238 = vlaneseq
    %v239 = vshrl.u32 %v238, 7
    %v240 = vsub.s32 3, %v239
    %v241 = vrot.slane %v224, %v240
    %v246 = vmul.f32 %v223, %v229
    %v247 = vmul.f32 %v222, %v233
    %v248 = vmul.f32 %v221, %v237
    %v249 = vmul.f32 %v220, %v241
    %250 = vrot.lane.b32.xlu0 %v205, 16
    %v251 = vpop.permute.xlu0 %250
    %252 = vrot.lane.b32.xlu0 %v206, 16
    %v253 = vpop.permute.xlu0 %252
    %254 = vrot.lane.b32.xlu0 %v207, 16
    %v255 = vpop.permute.xlu0 %254
    %256 = vrot.lane.b32.xlu0 %v208, 16
    %v257 = vpop.permute.xlu0 %256
    %vm258 = vcmp.lt.s32.totalorder %v218, 16
    %v259 = vsel %vm258, %v255, %v257
    %v260 = vsel %vm258, %v253, %v255
    %v261 = vsel %vm258, %v251, %v253
    %v262 = vsel %vm258, %v257, %v251
    %s263 = scalar_lea.vmem [#allocation2], 1
    %v264 = vld [vmem:[%s263] ss:$8 sm:$0xf]
    %v266 = vlaneseq
    %v267 = vshrl.u32 %v266, 7
    %v268 = vsub.s32 0, %v267
    %v269 = vrot.slane %v264, %v268
    %v270 = vlaneseq
    %v271 = vshrl.u32 %v270, 7
    %v272 = vsub.s32 1, %v271
    %v273 = vrot.slane %v264, %v272
    %v274 = vlaneseq
    %v275 = vshrl.u32 %v274, 7
    %v276 = vsub.s32 2, %v275
    %v277 = vrot.slane %v264, %v276
    %v278 = vlaneseq
    %v279 = vshrl.u32 %v278, 7
    %v280 = vsub.s32 3, %v279
    %v281 = vrot.slane %v264, %v280
    %v286 = vmul.f32 %v262, %v269
    %v287 = vmul.f32 %v261, %v273
    %v288 = vmul.f32 %v260, %v277
    %v289 = vmul.f32 %v259, %v281
    %290 = vrot.lane.b32.xlu0 %v205, 15
    %v291 = vpop.permute.xlu0 %290
    %292 = vrot.lane.b32.xlu0 %v206, 15
    %v293 = vpop.permute.xlu0 %292
    %294 = vrot.lane.b32.xlu0 %v207, 15
    %v295 = vpop.permute.xlu0 %294
    %296 = vrot.lane.b32.xlu0 %v208, 15
    %v297 = vpop.permute.xlu0 %296
    %vm298 = vcmp.lt.s32.totalorder %v218, 15
    %v299 = vsel %vm298, %v295, %v297
    %v300 = vsel %vm298, %v293, %v295
    %v301 = vsel %vm298, %v291, %v293
    %v302 = vsel %vm298, %v297, %v291
    %s303 = scalar_lea.vmem [#allocation2], 2
    %v304 = vld [vmem:[%s303] ss:$8 sm:$0xf]
    %v306 = vlaneseq
    %v307 = vshrl.u32 %v306, 7
    %v308 = vsub.s32 0, %v307
    %v309 = vrot.slane %v304, %v308
    %v310 = vlaneseq
    %v311 = vshrl.u32 %v310, 7
    %v312 = vsub.s32 1, %v311
    %v313 = vrot.slane %v304, %v312
    %v314 = vlaneseq
    %v315 = vshrl.u32 %v314, 7
    %v316 = vsub.s32 2, %v315
    %v317 = vrot.slane %v304, %v316
    %v318 = vlaneseq
    %v319 = vshrl.u32 %v318, 7
    %v320 = vsub.s32 3, %v319
    %v321 = vrot.slane %v304, %v320
    %v326 = vmul.f32 %v302, %v309
    %v327 = vmul.f32 %v301, %v313
    %v328 = vmul.f32 %v300, %v317
    %v329 = vmul.f32 %v299, %v321
    %330 = vrot.lane.b32.xlu0 %v205, 1
    %v331 = vpop.permute.xlu0 %330
    %332 = vrot.lane.b32.xlu0 %v206, 1
    %v333 = vpop.permute.xlu0 %332
    %334 = vrot.lane.b32.xlu0 %v207, 1
    %v335 = vpop.permute.xlu0 %334
    %336 = vrot.lane.b32.xlu0 %v208, 1
    %v337 = vpop.permute.xlu0 %336
    %vm338 = vcmp.lt.s32.totalorder %v218, 1
    %v339 = vsel %vm338, %v335, %v337
    %v340 = vsel %vm338, %v333, %v335
    %v341 = vsel %vm338, %v331, %v333
    %v342 = vsel %vm338, %v337, %v331
    %s343 = scalar_lea.vmem [#allocation2], 3
    %v344 = vld [vmem:[%s343] ss:$8 sm:$0xf]
    %v346 = vlaneseq
    %v347 = vshrl.u32 %v346, 7
    %v348 = vsub.s32 0, %v347
    %v349 = vrot.slane %v344, %v348
    %v350 = vlaneseq
    %v351 = vshrl.u32 %v350, 7
    %v352 = vsub.s32 1, %v351
    %v353 = vrot.slane %v344, %v352
    %v354 = vlaneseq
    %v355 = vshrl.u32 %v354, 7
    %v356 = vsub.s32 2, %v355
    %v357 = vrot.slane %v344, %v356
    %v358 = vlaneseq
    %v359 = vshrl.u32 %v358, 7
    %v360 = vsub.s32 3, %v359
    %v361 = vrot.slane %v344, %v360
    %v366 = vmul.f32 %v342, %v349
    %v367 = vmul.f32 %v341, %v353
    %v368 = vmul.f32 %v340, %v357
    %v369 = vmul.f32 %v339, %v361
    %370 = vrot.lane.b32.xlu0 %v205, 127
    %v371 = vpop.permute.xlu0 %370
    %372 = vrot.lane.b32.xlu0 %v206, 127
    %v373 = vpop.permute.xlu0 %372
    %374 = vrot.lane.b32.xlu0 %v207, 127
    %v375 = vpop.permute.xlu0 %374
    %376 = vrot.lane.b32.xlu0 %v208, 127
    %v377 = vpop.permute.xlu0 %376
    %vm378 = vcmp.lt.s32.totalorder %v218, 127
    %v379 = vsel %vm378, %v375, %v377
    %v380 = vsel %vm378, %v373, %v375
    %v381 = vsel %vm378, %v371, %v373
    %v382 = vsel %vm378, %v377, %v371
    %s383 = scalar_lea.vmem [#allocation2], 5
    %v384 = vld [vmem:[%s383] ss:$8 sm:$0xf]
    %v386 = vlaneseq
    %v387 = vshrl.u32 %v386, 7
    %v388 = vsub.s32 0, %v387
    %v389 = vrot.slane %v384, %v388
    %v390 = vlaneseq
    %v391 = vshrl.u32 %v390, 7
    %v392 = vsub.s32 1, %v391
    %v393 = vrot.slane %v384, %v392
    %v394 = vlaneseq
    %v395 = vshrl.u32 %v394, 7
    %v396 = vsub.s32 2, %v395
    %v397 = vrot.slane %v384, %v396
    %v398 = vlaneseq
    %v399 = vshrl.u32 %v398, 7
    %v400 = vsub.s32 3, %v399
    %v401 = vrot.slane %v384, %v400
    %v406 = vmul.f32 %v381, %v389
    %v407 = vmul.f32 %v380, %v393
    %v408 = vmul.f32 %v379, %v397
    %v409 = vmul.f32 %v382, %v401
    %410 = vrot.lane.b32.xlu0 %v205, 113
    %v411 = vpop.permute.xlu0 %410
    %412 = vrot.lane.b32.xlu0 %v206, 113
    %v413 = vpop.permute.xlu0 %412
    %414 = vrot.lane.b32.xlu0 %v207, 113
    %v415 = vpop.permute.xlu0 %414
    %416 = vrot.lane.b32.xlu0 %v208, 113
    %v417 = vpop.permute.xlu0 %416
    %vm418 = vcmp.lt.s32.totalorder %v218, 113
    %v419 = vsel %vm418, %v415, %v417
    %v420 = vsel %vm418, %v413, %v415
    %v421 = vsel %vm418, %v411, %v413
    %v422 = vsel %vm418, %v417, %v411
    %s423 = scalar_lea.vmem [#allocation2], 6
    %v424 = vld [vmem:[%s423] ss:$8 sm:$0xf]
    %v426 = vlaneseq
    %v427 = vshrl.u32 %v426, 7
    %v428 = vsub.s32 0, %v427
    %v429 = vrot.slane %v424, %v428
    %v430 = vlaneseq
    %v431 = vshrl.u32 %v430, 7
    %v432 = vsub.s32 1, %v431
    %v433 = vrot.slane %v424, %v432
    %v434 = vlaneseq
    %v435 = vshrl.u32 %v434, 7
    %v436 = vsub.s32 2, %v435
    %v437 = vrot.slane %v424, %v436
    %v438 = vlaneseq
    %v439 = vshrl.u32 %v438, 7
    %v440 = vsub.s32 3, %v439
    %v441 = vrot.slane %v424, %v440
    %v446 = vmul.f32 %v421, %v429
    %v447 = vmul.f32 %v420, %v433
    %v448 = vmul.f32 %v419, %v437
    %v449 = vmul.f32 %v422, %v441
    %450 = vrot.lane.b32.xlu0 %v205, 112
    %v451 = vpop.permute.xlu0 %450
    %452 = vrot.lane.b32.xlu0 %v206, 112
    %v453 = vpop.permute.xlu0 %452
    %454 = vrot.lane.b32.xlu0 %v207, 112
    %v455 = vpop.permute.xlu0 %454
    %456 = vrot.lane.b32.xlu0 %v208, 112
    %v457 = vpop.permute.xlu0 %456
    %vm458 = vcmp.lt.s32.totalorder %v218, 112
    %v459 = vsel %vm458, %v455, %v457
    %v460 = vsel %vm458, %v453, %v455
    %v461 = vsel %vm458, %v451, %v453
    %v462 = vsel %vm458, %v457, %v451
    %s463 = scalar_lea.vmem [#allocation2], 7
    %v464 = vld [vmem:[%s463] ss:$8 sm:$0xf]
    %v466 = vlaneseq
    %v467 = vshrl.u32 %v466, 7
    %v468 = vsub.s32 0, %v467
    %v469 = vrot.slane %v464, %v468
    %v470 = vlaneseq
    %v471 = vshrl.u32 %v470, 7
    %v472 = vsub.s32 1, %v471
    %v473 = vrot.slane %v464, %v472
    %v474 = vlaneseq
    %v475 = vshrl.u32 %v474, 7
    %v476 = vsub.s32 2, %v475
    %v477 = vrot.slane %v464, %v476
    %v478 = vlaneseq
    %v479 = vshrl.u32 %v478, 7
    %v480 = vsub.s32 3, %v479
    %v481 = vrot.slane %v464, %v480
    %v486 = vmul.f32 %v461, %v469
    %v487 = vmul.f32 %v460, %v473
    %v488 = vmul.f32 %v459, %v477
    %v489 = vmul.f32 %v462, %v481
    %490 = vrot.lane.b32.xlu0 %v205, 111
    %v491 = vpop.permute.xlu0 %490
    %492 = vrot.lane.b32.xlu0 %v206, 111
    %v493 = vpop.permute.xlu0 %492
    %494 = vrot.lane.b32.xlu0 %v207, 111
    %v495 = vpop.permute.xlu0 %494
    %496 = vrot.lane.b32.xlu0 %v208, 111
    %v497 = vpop.permute.xlu0 %496
    %vm498 = vcmp.lt.s32.totalorder %v218, 111
    %v499 = vsel %vm498, %v495, %v497
    %v500 = vsel %vm498, %v493, %v495
    %v501 = vsel %vm498, %v491, %v493
    %v502 = vsel %vm498, %v497, %v491
    %s503 = scalar_lea.vmem [#allocation2], 32
    %v504 = vld [vmem:[%s503] ss:$8 sm:$0xf]
    %v506 = vlaneseq
    %v507 = vshrl.u32 %v506, 7
    %v508 = vsub.s32 0, %v507
    %v509 = vrot.slane %v504, %v508
    %v510 = vlaneseq
    %v511 = vshrl.u32 %v510, 7
    %v512 = vsub.s32 1, %v511
    %v513 = vrot.slane %v504, %v512
    %v514 = vlaneseq
    %v515 = vshrl.u32 %v514, 7
    %v516 = vsub.s32 2, %v515
    %v517 = vrot.slane %v504, %v516
    %v518 = vlaneseq
    %v519 = vshrl.u32 %v518, 7
    %v520 = vsub.s32 3, %v519
    %v521 = vrot.slane %v504, %v520
    %v526 = vmul.f32 %v501, %v509
    %v527 = vmul.f32 %v500, %v513
    %v528 = vmul.f32 %v499, %v517
    %v529 = vmul.f32 %v502, %v521
    %v530 = vld [vmem:[%s4] sm:$0xff]
    %v531 = vld [vmem:[%s5] sm:$0xff]
    %533 = vset.pattern.permute.xlu0 0
    %534 = vperm.xlu0 %533, %v531
    %v535 = vpop.permute.xlu0 %534
    %vm537 = vcmask 588800
    %v539 = vsel %vm537, %v530, 0
    %541 = vmatprep.subr.mxu0 %v247
    %542 = vmatpush1.msra.mxu0 %v246
    %543 = vmatprep.subr.mxu0 %v287
    %544 = vmatpush1.msra.mxu0 %v286
    %545 = vmatprep.subr.mxu0 %v327
    %546 = vmatpush1.msra.mxu0 %v326
    %547 = vmatprep.subr.mxu0 %v367
    %548 = vmatpush1.msra.mxu0 %v366
    %549 = vmatprep.subr.mxu0 %v206
    %550 = vmatpush1.msra.mxu0 %v205
    %551 = vmatprep.subr.mxu0 %v407
    %552 = vmatpush1.msra.mxu0 %v406
    %553 = vmatprep.subr.mxu0 %v447
    %554 = vmatpush1.msra.mxu0 %v446
    %555 = vmatprep.subr.mxu0 %v487
    %556 = vmatpush1.msra.mxu0 %v486
    %557 = vmatprep.subr.mxu0 %v527
    %558 = vmatpush1.msra.mxu0 %v526
    %559 = vmatprep.subr.mxu0 0.0
    %560 = vmatpush1.msra.mxu0 0.0
    %561 = vmatprep.subr.mxu0 0.0
    %562 = vmatpush1.msra.mxu0 0.0
    %563 = vmatprep.subr.mxu0 0.0
    %564 = vmatpush1.msra.mxu0 0.0
    %565 = vmatprep.subr.mxu0 0.0
    %566 = vmatpush1.msra.mxu0 0.0
    %567 = vmatprep.subr.mxu0 0.0
    %568 = vmatpush1.msra.mxu0 0.0
    %569 = vmatprep.subr.mxu0 0.0
    %570 = vmatpush1.msra.mxu0 0.0
    %571 = vmatprep.subr.mxu0 0.0
    %572 = vmatpush1.msra.mxu0 0.0
    %573 = vmatprep.subr.mxu0 0.0
    %574 = vmatpush1.msra.mxu0 0.0
    %575 = vmatprep.subr.mxu0 0.0
    %576 = vmatpush1.msra.mxu0 0.0
    %577 = vmatprep.subr.mxu0 0.0
    %578 = vmatpush1.msra.mxu0 0.0
    %579 = vmatprep.subr.mxu0 0.0
    %580 = vmatpush1.msra.mxu0 0.0
    %581 = vmatprep.subr.mxu0 0.0
    %582 = vmatpush1.msra.mxu0 0.0
    %583 = vmatprep.subr.mxu0 0.0
    %584 = vmatpush1.msra.mxu0 0.0
    %585 = vmatprep.subr.mxu0 0.0
    %586 = vmatpush1.msra.mxu0 0.0
    %587 = vmatprep.subr.mxu0 0.0
    %588 = vmatpush1.msra.mxu0 0.0
    %589 = vmatprep.subr.mxu0 0.0
    %590 = vmatpush1.msra.mxu0 0.0
    %591 = vmatprep.subr.mxu0 0.0
    %592 = vmatpush1.msra.mxu0 0.0
    %593 = vmatprep.subr.mxu0 0.0
    %594 = vmatpush1.msra.mxu0 0.0
    %595 = vmatprep.subr.mxu0 0.0
    %596 = vmatpush1.msra.mxu0 0.0
    %597 = vmatprep.subr.mxu0 0.0
    %598 = vmatpush1.msra.mxu0 0.0
    %599 = vmatprep.subr.mxu0 0.0
    %600 = vmatpush1.msra.mxu0 0.0
    %601 = vmatprep.subr.mxu0 0.0
    %602 = vmatpush1.msra.mxu0 0.0
    %603 = vmatprep.subr.mxu0 0.0
    %604 = vmatpush1.msra.mxu0 0.0
    %605 = vmatprep.mubr.f32.mxu0 0.0
    %606 = vmatmul.mubr.f32.gmra.mrb[0].mxu0 %v539
    %v607 = vpop.f32.mrb[0].mxu0
    %v608 = vadd.f32 %v535, %v607
    %v609 = vpop.f32.mrb[0].mxu0
    %v610 = vadd.f32 %v535, %v609
    %611 = vdwg.mxu0
    %612 = vmatprep.subr.mxu0 %v249
    %613 = vmatpush1.msra.mxu0 %v248
    %614 = vmatprep.subr.mxu0 %v289
    %615 = vmatpush1.msra.mxu0 %v288
    %616 = vmatprep.subr.mxu0 %v329
    %617 = vmatpush1.msra.mxu0 %v328
    %618 = vmatprep.subr.mxu0 %v369
    %619 = vmatpush1.msra.mxu0 %v368
    %620 = vmatprep.subr.mxu0 %v208
    %621 = vmatpush1.msra.mxu0 %v207
    %622 = vmatprep.subr.mxu0 %v409
    %623 = vmatpush1.msra.mxu0 %v408
    %624 = vmatprep.subr.mxu0 %v449
    %625 = vmatpush1.msra.mxu0 %v448
    %626 = vmatprep.subr.mxu0 %v489
    %627 = vmatpush1.msra.mxu0 %v488
    %628 = vmatprep.subr.mxu0 %v529
    %629 = vmatpush1.msra.mxu0 %v528
    %630 = vmatprep.subr.mxu0 0.0
    %631 = vmatpush1.msra.mxu0 0.0
    %632 = vmatprep.subr.mxu0 0.0
    %633 = vmatpush1.msra.mxu0 0.0
    %634 = vmatprep.subr.mxu0 0.0
    %635 = vmatpush1.msra.mxu0 0.0
    %636 = vmatprep.subr.mxu0 0.0
    %637 = vmatpush1.msra.mxu0 0.0
    %638 = vmatprep.subr.mxu0 0.0
    %639 = vmatpush1.msra.mxu0 0.0
    %640 = vmatprep.subr.mxu0 0.0
    %641 = vmatpush1.msra.mxu0 0.0
    %642 = vmatprep.subr.mxu0 0.0
    %643 = vmatpush1.msra.mxu0 0.0
    %644 = vmatprep.subr.mxu0 0.0
    %645 = vmatpush1.msra.mxu0 0.0
    %646 = vmatprep.subr.mxu0 0.0
    %647 = vmatpush1.msra.mxu0 0.0
    %648 = vmatprep.subr.mxu0 0.0
    %649 = vmatpush1.msra.mxu0 0.0
    %650 = vmatprep.subr.mxu0 0.0
    %651 = vmatpush1.msra.mxu0 0.0
    %652 = vmatprep.subr.mxu0 0.0
    %653 = vmatpush1.msra.mxu0 0.0
    %654 = vmatprep.subr.mxu0 0.0
    %655 = vmatpush1.msra.mxu0 0.0
    %656 = vmatprep.subr.mxu0 0.0
    %657 = vmatpush1.msra.mxu0 0.0
    %658 = vmatprep.subr.mxu0 0.0
    %659 = vmatpush1.msra.mxu0 0.0
    %660 = vmatprep.subr.mxu0 0.0
    %661 = vmatpush1.msra.mxu0 0.0
    %662 = vmatprep.subr.mxu0 0.0
    %663 = vmatpush1.msra.mxu0 0.0
    %664 = vmatprep.subr.mxu0 0.0
    %665 = vmatpush1.msra.mxu0 0.0
    %666 = vmatprep.subr.mxu0 0.0
    %667 = vmatpush1.msra.mxu0 0.0
    %668 = vmatprep.subr.mxu0 0.0
    %669 = vmatpush1.msra.mxu0 0.0
    %670 = vmatprep.subr.mxu0 0.0
    %671 = vmatpush1.msra.mxu0 0.0
    %672 = vmatprep.subr.mxu0 0.0
    %673 = vmatpush1.msra.mxu0 0.0
    %674 = vmatprep.subr.mxu0 0.0
    %675 = vmatpush1.msra.mxu0 0.0
    %676 = vmatprep.mubr.f32.mxu0 0.0
    %677 = vmatmul.mubr.f32.gmra.mrb[0].mxu0 %v539
    %v678 = vpop.f32.mrb[0].mxu0
    %v679 = vadd.f32 %v535, %v678
    %v680 = vpop.f32.mrb[0].mxu0
    %v681 = vadd.f32 %v535, %v680
    %682 = vdwg.mxu0
    %v683 = vmax.f32 %v608, 0.0
    %v684 = vmax.f32 %v610, 0.0
    %v685 = vmax.f32 %v679, 0.0
    %v686 = vmax.f32 %v681, 0.0
    %v687 = vld [vmem:[%s6] sm:$0xff]
    %v688 = vld [vmem:[%s6 + $0x8] sm:$0xff]
    %v689 = vld [vmem:[%s6 + $0x10] sm:$0xff]
    %v690 = vld [vmem:[%s6 + $0x18] sm:$0xff]
    %v691 = vld [vmem:[%s7] sm:$0xff]
    %v692 = vld [vmem:[%s7 + $0x8] sm:$0xff]
    %v693 = vld [vmem:[%s7 + $0x10] sm:$0xff]
    %v694 = vld [vmem:[%s7 + $0x18] sm:$0xff]
    %696 = vset.pattern.permute.xlu0 0
    %697 = vperm.xlu0 %696, %v691
    %v698 = vpop.permute.xlu0 %697
    %701 = vset.pattern.permute.xlu0 0
    %702 = vperm.xlu0 %701, %v692
    %v703 = vpop.permute.xlu0 %702
    %706 = vset.pattern.permute.xlu0 0
    %707 = vperm.xlu0 %706, %v693
    %v708 = vpop.permute.xlu0 %707
    %711 = vset.pattern.permute.xlu0 0
    %712 = vperm.xlu0 %711, %v694
    %v713 = vpop.permute.xlu0 %712
    %vm715 = vcmask 195584
    %v717 = vsel %vm715, %v687, 0
    %v720 = vsel %vm715, %v688, 0
    %v723 = vsel %vm715, %v689, 0
    %v726 = vsel %vm715, %v690, 0
    %728 = vmatprep.subr.mxu0 %v684
    %729 = vmatpush1.msra.mxu0 %v683
    %730 = vmatprep.subr.mxu0 %v45
    %731 = vmatpush1.msra.mxu0 %v44
    %732 = vmatprep.subr.mxu0 %v49
    %733 = vmatpush1.msra.mxu0 %v48
    %734 = vmatprep.subr.mxu0 0.0
    %735 = vmatpush1.msra.mxu0 0.0
    %736 = vmatprep.subr.mxu0 0.0
    %737 = vmatpush1.msra.mxu0 0.0
    %738 = vmatprep.subr.mxu0 0.0
    %739 = vmatpush1.msra.mxu0 0.0
    %740 = vmatprep.subr.mxu0 0.0
    %741 = vmatpush1.msra.mxu0 0.0
    %742 = vmatprep.subr.mxu0 0.0
    %743 = vmatpush1.msra.mxu0 0.0
    %744 = vmatprep.subr.mxu0 0.0
    %745 = vmatpush1.msra.mxu0 0.0
    %746 = vmatprep.subr.mxu0 0.0
    %747 = vmatpush1.msra.mxu0 0.0
    %748 = vmatprep.subr.mxu0 0.0
    %749 = vmatpush1.msra.mxu0 0.0
    %750 = vmatprep.subr.mxu0 0.0
    %751 = vmatpush1.msra.mxu0 0.0
    %752 = vmatprep.subr.mxu0 0.0
    %753 = vmatpush1.msra.mxu0 0.0
    %754 = vmatprep.subr.mxu0 0.0
    %755 = vmatpush1.msra.mxu0 0.0
    %756 = vmatprep.subr.mxu0 0.0
    %757 = vmatpush1.msra.mxu0 0.0
    %758 = vmatprep.subr.mxu0 0.0
    %759 = vmatpush1.msra.mxu0 0.0
    %760 = vmatprep.subr.mxu0 0.0
    %761 = vmatpush1.msra.mxu0 0.0
    %762 = vmatprep.subr.mxu0 0.0
    %763 = vmatpush1.msra.mxu0 0.0
    %764 = vmatprep.subr.mxu0 0.0
    %765 = vmatpush1.msra.mxu0 0.0
    %766 = vmatprep.subr.mxu0 0.0
    %767 = vmatpush1.msra.mxu0 0.0
    %768 = vmatprep.subr.mxu0 0.0
    %769 = vmatpush1.msra.mxu0 0.0
    %770 = vmatprep.subr.mxu0 0.0
    %771 = vmatpush1.msra.mxu0 0.0
    %772 = vmatprep.subr.mxu0 0.0
    %773 = vmatpush1.msra.mxu0 0.0
    %774 = vmatprep.subr.mxu0 0.0
    %775 = vmatpush1.msra.mxu0 0.0
    %776 = vmatprep.subr.mxu0 0.0
    %777 = vmatpush1.msra.mxu0 0.0
    %778 = vmatprep.subr.mxu0 0.0
    %779 = vmatpush1.msra.mxu0 0.0
    %780 = vmatprep.subr.mxu0 0.0
    %781 = vmatpush1.msra.mxu0 0.0
    %782 = vmatprep.subr.mxu0 0.0
    %783 = vmatpush1.msra.mxu0 0.0
    %784 = vmatprep.subr.mxu0 0.0
    %785 = vmatpush1.msra.mxu0 0.0
    %786 = vmatprep.subr.mxu0 0.0
    %787 = vmatpush1.msra.mxu0 0.0
    %788 = vmatprep.subr.mxu0 0.0
    %789 = vmatpush1.msra.mxu0 0.0
    %790 = vmatprep.subr.mxu0 0.0
    %791 = vmatpush1.msra.mxu0 0.0
    %792 = vmatprep.mubr.f32.mxu0 0.0
    %793 = vmatmul.mubr.f32.gmra.mrb[0].mxu0 %v717
    %v794 = vpop.f32.mrb[0].mxu0
    %v795 = vadd.f32 %v698, %v794
    %v796 = vpop.f32.mrb[0].mxu0
    %v797 = vadd.f32 %v698, %v796
    %798 = vmatprep.mubr.f32.mxu0 0.0
    %799 = vmatmul.mubr.f32.gmra.mrb[0].mxu0 %v720
    %v800 = vpop.f32.mrb[0].mxu0
    %v801 = vadd.f32 %v703, %v800
    %v802 = vpop.f32.mrb[0].mxu0
    %v803 = vadd.f32 %v703, %v802
    %804 = vmatprep.mubr.f32.mxu0 0.0
    %805 = vmatmul.mubr.f32.gmra.mrb[0].mxu0 %v723
    %v806 = vpop.f32.mrb[0].mxu0
    %v807 = vadd.f32 %v708, %v806
    %v808 = vpop.f32.mrb[0].mxu0
    %v809 = vadd.f32 %v708, %v808
    %810 = vmatprep.mubr.f32.mxu0 0.0
    %811 = vmatmul.mubr.f32.gmra.mrb[0].mxu0 %v726
    %v812 = vpop.f32.mrb[0].mxu0
    %v813 = vadd.f32 %v713, %v812
    %v814 = vpop.f32.mrb[0].mxu0
    %v815 = vadd.f32 %v713, %v814
    %816 = vdwg.mxu0
    %817 = vmatprep.subr.mxu0 %v686
    %818 = vmatpush1.msra.mxu0 %v685
    %819 = vmatprep.subr.mxu0 %v47
    %820 = vmatpush1.msra.mxu0 %v46
    %821 = vmatprep.subr.mxu0 %v51
    %822 = vmatpush1.msra.mxu0 %v50
    %823 = vmatprep.subr.mxu0 0.0
    %824 = vmatpush1.msra.mxu0 0.0
    %825 = vmatprep.subr.mxu0 0.0
    %826 = vmatpush1.msra.mxu0 0.0
    %827 = vmatprep.subr.mxu0 0.0
    %828 = vmatpush1.msra.mxu0 0.0
    %829 = vmatprep.subr.mxu0 0.0
    %830 = vmatpush1.msra.mxu0 0.0
    %831 = vmatprep.subr.mxu0 0.0
    %832 = vmatpush1.msra.mxu0 0.0
    %833 = vmatprep.subr.mxu0 0.0
    %834 = vmatpush1.msra.mxu0 0.0
    %835 = vmatprep.subr.mxu0 0.0
    %836 = vmatpush1.msra.mxu0 0.0
    %837 = vmatprep.subr.mxu0 0.0
    %838 = vmatpush1.msra.mxu0 0.0
    %839 = vmatprep.subr.mxu0 0.0
    %840 = vmatpush1.msra.mxu0 0.0
    %841 = vmatprep.subr.mxu0 0.0
    %842 = vmatpush1.msra.mxu0 0.0
    %843 = vmatprep.subr.mxu0 0.0
    %844 = vmatpush1.msra.mxu0 0.0
    %845 = vmatprep.subr.mxu0 0.0
    %846 = vmatpush1.msra.mxu0 0.0
    %847 = vmatprep.subr.mxu0 0.0
    %848 = vmatpush1.msra.mxu0 0.0
    %849 = vmatprep.subr.mxu0 0.0
    %850 = vmatpush1.msra.mxu0 0.0
    %851 = vmatprep.subr.mxu0 0.0
    %852 = vmatpush1.msra.mxu0 0.0
    %853 = vmatprep.subr.mxu0 0.0
    %854 = vmatpush1.msra.mxu0 0.0
    %855 = vmatprep.subr.mxu0 0.0
    %856 = vmatpush1.msra.mxu0 0.0
    %857 = vmatprep.subr.mxu0 0.0
    %858 = vmatpush1.msra.mxu0 0.0
    %859 = vmatprep.subr.mxu0 0.0
    %860 = vmatpush1.msra.mxu0 0.0
    %861 = vmatprep.subr.mxu0 0.0
    %862 = vmatpush1.msra.mxu0 0.0
    %863 = vmatprep.subr.mxu0 0.0
    %864 = vmatpush1.msra.mxu0 0.0
    %865 = vmatprep.subr.mxu0 0.0
    %866 = vmatpush1.msra.mxu0 0.0
    %867 = vmatprep.subr.mxu0 0.0
    %868 = vmatpush1.msra.mxu0 0.0
    %869 = vmatprep.subr.mxu0 0.0
    %870 = vmatpush1.msra.mxu0 0.0
    %871 = vmatprep.subr.mxu0 0.0
    %872 = vmatpush1.msra.mxu0 0.0
    %873 = vmatprep.subr.mxu0 0.0
    %874 = vmatpush1.msra.mxu0 0.0
    %875 = vmatprep.subr.mxu0 0.0
    %876 = vmatpush1.msra.mxu0 0.0
    %877 = vmatprep.subr.mxu0 0.0
    %878 = vmatpush1.msra.mxu0 0.0
    %879 = vmatprep.subr.mxu0 0.0
    %880 = vmatpush1.msra.mxu0 0.0
    %881 = vmatprep.mubr.f32.mxu0 0.0
    %882 = vmatmul.mubr.f32.gmra.mrb[0].mxu0 %v717
    %v883 = vpop.f32.mrb[0].mxu0
    %v884 = vadd.f32 %v698, %v883
    %v885 = vpop.f32.mrb[0].mxu0
    %v886 = vadd.f32 %v698, %v885
    %887 = vmatprep.mubr.f32.mxu0 0.0
    %888 = vmatmul.mubr.f32.gmra.mrb[0].mxu0 %v720
    %v889 = vpop.f32.mrb[0].mxu0
    %v890 = vadd.f32 %v703, %v889
    %v891 = vpop.f32.mrb[0].mxu0
    %v892 = vadd.f32 %v703, %v891
    %893 = vmatprep.mubr.f32.mxu0 0.0
    %894 = vmatmul.mubr.f32.gmra.mrb[0].mxu0 %v723
    %v895 = vpop.f32.mrb[0].mxu0
    %v896 = vadd.f32 %v708, %v895
    %v897 = vpop.f32.mrb[0].mxu0
    %v898 = vadd.f32 %v708, %v897
    %899 = vmatprep.mubr.f32.mxu0 0.0
    %900 = vmatmul.mubr.f32.gmra.mrb[0].mxu0 %v726
    %v901 = vpop.f32.mrb[0].mxu0
    %v902 = vadd.f32 %v713, %v901
    %v903 = vpop.f32.mrb[0].mxu0
    %v904 = vadd.f32 %v713, %v903
    %905 = vdwg.mxu0
    %v906 = vmax.f32 %v795, 0.0
    %v907 = vmax.f32 %v797, 0.0
    %v908 = vmax.f32 %v884, 0.0
    %v909 = vmax.f32 %v886, 0.0
    %v910 = vmax.f32 %v801, 0.0
    %v911 = vmax.f32 %v803, 0.0
    %v912 = vmax.f32 %v890, 0.0
    %v913 = vmax.f32 %v892, 0.0
    %v914 = vmax.f32 %v807, 0.0
    %v915 = vmax.f32 %v809, 0.0
    %v916 = vmax.f32 %v896, 0.0
    %v917 = vmax.f32 %v898, 0.0
    %v918 = vmax.f32 %v813, 0.0
    %v919 = vmax.f32 %v815, 0.0
    %v920 = vmax.f32 %v902, 0.0
    %v921 = vmax.f32 %v904, 0.0
    %922 = vst [vmem:[#allocation5] sm:$0xff] %v906
    %923 = vst [vmem:[#allocation5 + $0x8] sm:$0xff] %v907
    %924 = vst [vmem:[#allocation5 + $0x10] sm:$0xff] %v908
    %925 = vst [vmem:[#allocation5 + $0x18] sm:$0xff] %v909
    %926 = vst [vmem:[#allocation5 + $0x20] sm:$0xff] %v910
    %927 = vst [vmem:[#allocation5 + $0x28] sm:$0xff] %v911
    %928 = vst [vmem:[#allocation5 + $0x30] sm:$0xff] %v912
    %929 = vst [vmem:[#allocation5 + $0x38] sm:$0xff] %v913
    %930 = vst [vmem:[#allocation5 + $0x40] sm:$0xff] %v914
    %931 = vst [vmem:[#allocation5 + $0x48] sm:$0xff] %v915
    %932 = vst [vmem:[#allocation5 + $0x50] sm:$0xff] %v916
    %933 = vst [vmem:[#allocation5 + $0x58] sm:$0xff] %v917
    %934 = vst [vmem:[#allocation5 + $0x60] sm:$0xff] %v918
    %935 = vst [vmem:[#allocation5 + $0x68] sm:$0xff] %v919
    %936 = vst [vmem:[#allocation5 + $0x70] sm:$0xff] %v920
    %937 = vst [vmem:[#allocation5 + $0x78] sm:$0xff] %v921
    // Predicated region
    $region38: #{tpu_custom_call.1} parent=1 // pred_check
      _
    $region39: #{tpu_custom_call.1} parent=1 // pred_check_branch
      %939 = sbr.rel (0) target = $region41
    $region40: #{tpu_custom_call.1} parent=1 // pred_region
      %s941 = ssub.s32 2048, 2048
      %942 = vsyncadd [#allocation4], %s941
      %s943 = sshll.u32 [#allocation5], 4
      %s944 = int_to_ptr.vmem [resolvable:$true] %s943
      %949 = dma.vmem_to_hbm [thread:$0]  %s944, 2048, %s8, [#allocation4], 512, 512, 32
    $region41: #{tpu_custom_call.1} parent=1 // pred_fallthru
      _
    // Predicated region
    $region42: #{tpu_custom_call.1} parent=1 // pred_check
      _
    $region43: #{tpu_custom_call.1} parent=1 // pred_check_branch
      %951 = sbr.rel (0) target = $region45
    $region44: #{tpu_custom_call.1} parent=1 // pred_region
      %952 = dma.done [#allocation4], 2048
    $region45: #{tpu_custom_call.1} parent=1 // pred_fallthru
      _
    %953 = vsyncpa [#allocation3], 1
    %954 = vsyncpa [#allocation4], 1

</llo_original>
